<compile_context>
chip_gen: v7x
topology: tpu7x:2x2x1
jax: 0.10.0
libtpu: 0.0.40
codegen_flags: <defaults>
</compile_context>

<pallas_src>
import jax
import jax.numpy as jnp
from jax.experimental import pallas as pl
from jax.experimental.pallas import tpu as pltpu

# textname == 'text' indices (module's first branch); the other branch is kept
# for completeness and selected statically at trace time.
TEXT_START_IDX = (12, 16, 21, 24, 26, 30)
TEXT_END_IDX = (14, 19, 22, 24, 28, 33)
OTHER_START_IDX = (17, 19, 21, 23, 25, 27)
OTHER_END_IDX = (18, 20, 22, 24, 26, 28)
NUM_CLASS = 6
TABLE_ROWS = 128  # padded (vocab + 2 token-type rows), lane-aligned


def _log_softmax_lastdim(x):
    m = jnp.max(x, axis=-1, keepdims=True)
    y = x - m
    return y - jnp.log(jnp.sum(jnp.exp(y), axis=-1, keepdims=True))


def fused_qa_kernel(meta_ref, table_ref, w_ref, bias_ref, out_ref):
    """Fused synthetic encoder + QA head + static selection + log_softmax.

    meta_ref : [8, R] int32   row 0 = word-emb row ids at the selected
                              positions, row 1 = token-type row ids (already
                              offset into the padded table), row 2 = attention
                              mask, rows 3..7 zero.  R = 2*B*6, columns ordered
                              [start b=0 .. start b=B-1, end b=0 .. end b=B-1].
    table_ref: [H, 128] bf16  transposed padded embedding table
                              (cols 0..V-1 = word_emb.T, V..V+1 = type_emb.T).
    w_ref    : [8, H] bf16    row 0 = w_start, row 1 = w_end, rest zero.
    bias_ref : SMEM (2,) f32  [b_start, b_end].
    out_ref  : [2B, 6] f32    rows 0..B-1 = start log-softmax, B..2B-1 = end.
    """
    R = meta_ref.shape[1]
    V2 = table_ref.shape[1]
    B = out_ref.shape[0] // 2
    NC = out_ref.shape[1]
    half = R // 2  # B * NC

    ids = meta_ref[0:1, :]                              # [1, R]
    tt = meta_ref[1:2, :]                               # [1, R]
    msk = meta_ref[2:3, :].astype(jnp.float32)          # [1, R]

    # In-kernel one-hot (word row OR type row), masked -> [V2, R].
    vidx = jax.lax.broadcasted_iota(jnp.int32, (V2, R), 0)
    hit = jnp.logical_or(vidx == ids, vidx == tt)
    onehot = jnp.where(hit, msk, 0.0).astype(jnp.bfloat16)

    # Fused synthetic encoder: hidden^T at the selected positions, [H, R].
    h_t = jnp.dot(table_ref[...], onehot, preferred_element_type=jnp.float32)

    # QA head: rows 0/1 are start/end-weight logits for every selected column.
    logits = jnp.dot(w_ref[...], h_t.astype(jnp.bfloat16),
                     preferred_element_type=jnp.float32)        # [8, R]

    # Static selection: columns 0..half-1 are start positions (b-major),
    # columns half..R-1 are end positions (b-major).
    start_rows = [logits[0:1, b * NC:(b + 1) * NC] for b in range(B)]
    end_rows = [logits[1:2, half + b * NC: half + (b + 1) * NC]
                for b in range(B)]
    start_sel = jnp.concatenate(start_rows, axis=0) + bias_ref[0]   # [B, NC]
    end_sel = jnp.concatenate(end_rows, axis=0) + bias_ref[1]       # [B, NC]

    out_ref[...] = jnp.concatenate(
        [_log_softmax_lastdim(start_sel), _log_softmax_lastdim(end_sel)],
        axis=0)


def synthetic_encoder(input_ids, token_type_ids, attention_mask,
                      word_emb, type_emb):
    # TODO(synk): the pretrained BERT/ERNIE QA transformer encoder (bert_All)
    # has no clean Pallas equivalent; a deterministic embedding encoder stands
    # in for its hidden states (used here only for the pure-JAX reference).
    h = word_emb[input_ids] + type_emb[token_type_ids]
    return h * attention_mask[..., None].astype(h.dtype)


def bert_mrc_all_semeval_forward(input_ids, token_type_ids, attention_mask,
                                 word_emb, type_emb, w_qa, b_qa,
                                 textname="text"):
    """Returns (Comment_predict_start, Comment_predict_end), each [B, 6]."""
    B, S = input_ids.shape
    V, H = word_emb.shape
    assert V + 2 <= TABLE_ROWS, "vocab must fit the 128-row padded table"

    if textname == "text":
        start_idx, end_idx = TEXT_START_IDX, TEXT_END_IDX
    else:
        start_idx, end_idx = OTHER_START_IDX, OTHER_END_IDX
    start_pos = jnp.array(start_idx, jnp.int32)
    end_pos = jnp.array(end_idx, jnp.int32)

    # --- tiny per-call metadata: ids / type-ids / mask at the 12 static
    # positions, flattened b-major, start block then end block -> [8, R] i32.
    R = 2 * B * NUM_CLASS
    ids_flat = jnp.concatenate(
        [input_ids[:, start_pos].reshape(-1), input_ids[:, end_pos].reshape(-1)])
    tt_flat = jnp.concatenate(
        [token_type_ids[:, start_pos].reshape(-1),
         token_type_ids[:, end_pos].reshape(-1)]) + V       # offset into table
    mask_flat = jnp.concatenate(
        [attention_mask[:, start_pos].reshape(-1),
         attention_mask[:, end_pos].reshape(-1)]).astype(jnp.int32)
    meta = (jnp.zeros((8, R), jnp.int32)
            .at[0, :].set(ids_flat.astype(jnp.int32))
            .at[1, :].set(tt_flat.astype(jnp.int32))
            .at[2, :].set(mask_flat))

    # --- parameter packing (in deployment this is done once per checkpoint).
    table_t = (jnp.zeros((H, TABLE_ROWS), jnp.bfloat16)
               .at[:, :V].set(word_emb.T.astype(jnp.bfloat16))
               .at[:, V:V + 2].set(type_emb.T.astype(jnp.bfloat16)))
    w8 = jnp.zeros((8, H), jnp.bfloat16).at[0:2, :].set(
        w_qa.astype(jnp.bfloat16))
    bias = b_qa.astype(jnp.float32)

    out = pl.pallas_call(
        fused_qa_kernel,
        out_shape=jax.ShapeDtypeStruct((2 * B, NUM_CLASS), jnp.float32),
        grid=(1,),
        in_specs=[
            pl.BlockSpec((8, R), lambda i: (0, 0)),
            pl.BlockSpec((H, TABLE_ROWS), lambda i: (0, 0)),
            pl.BlockSpec((8, H), lambda i: (0, 0)),
            pl.BlockSpec(memory_space=pltpu.MemorySpace.SMEM),
        ],
        out_specs=pl.BlockSpec((2 * B, NUM_CLASS), lambda i: (0, 0)),
        compiler_params=pltpu.CompilerParams(
            dimension_semantics=("arbitrary",)),
    )(meta, table_t, w8, bias)

    return out[:B], out[B:]


if __name__ == "__main__":
    B, S, H = 2, 64, 768      # seq must cover index 33; hidden = 768 (BERT)
    VOCAB = 100

    key = jax.random.PRNGKey(0)
    k1, k2, k3, k4, k5 = jax.random.split(key, 5)

    input_ids = jax.random.randint(k1, (B, S), 0, VOCAB, dtype=jnp.int32)
    token_type_ids = jnp.concatenate(
        [jnp.zeros((B, S // 2), jnp.int32), jnp.ones((B, S // 2), jnp.int32)],
        axis=1)
    attention_mask = jnp.ones((B, S), jnp.int32)

    # Deterministic synthetic parameters (no checkpoint loading).
    word_emb = 0.02 * jax.random.normal(k2, (VOCAB, H), jnp.float32)
    type_emb = 0.02 * jax.random.normal(k3, (2, H), jnp.float32)
    w_qa = 0.02 * jax.random.normal(k4, (2, H), jnp.float32)   # qa_outputs weight
    b_qa = 0.02 * jax.random.normal(k5, (2,), jnp.float32)     # qa_outputs bias

    out_start, out_end = bert_mrc_all_semeval_forward(
        input_ids, token_type_ids, attention_mask,
        word_emb, type_emb, w_qa, b_qa, textname="text")
    jax.block_until_ready((out_start, out_end))

    # Pure-JAX f32 reference (same synthetic encoder + QA head + selection).
    hidden_ref = synthetic_encoder(input_ids, token_type_ids, attention_mask,
                                   word_emb, type_emb)           # [B, S, H]
    logits_ref = hidden_ref @ w_qa.T + b_qa                      # [B, S, 2]
    ref_start = jax.nn.log_softmax(
        logits_ref[:, list(TEXT_START_IDX), 0], axis=1)
    ref_end = jax.nn.log_softmax(
        logits_ref[:, list(TEXT_END_IDX), 1], axis=1)

    assert out_start.shape == (B, NUM_CLASS) and out_end.shape == (B, NUM_CLASS)
    # Tolerance relaxed vs. f32 reference because the embedding table / QA
    # weights are fed to the MXU in bfloat16 (f32 accumulation).
    assert jnp.allclose(out_start, ref_start, atol=1e-2, rtol=1e-2)
    assert jnp.allclose(out_end, ref_end, atol=1e-2, rtol=1e-2)

    print("KERNEL_OK")
</pallas_src>

<mosaic_0001>
module attributes {stable_mosaic.version = 11 : i64} {
  func.func @fused_qa_kernel(%arg0: i32, %arg1: memref<8x24xi32, #tpu.memory_space<vmem>>, %arg2: memref<768x128xbf16, #tpu.memory_space<vmem>>, %arg3: memref<8x768xbf16, #tpu.memory_space<vmem>>, %arg4: memref<2xf32, #tpu.memory_space<smem>>, %arg5: memref<4x6xf32, #tpu.memory_space<vmem>>) attributes {dimension_semantics = [#tpu.dimension_semantics<arbitrary>], iteration_bounds = array<i64: 1>, scalar_prefetch = 0 : i64, scratch_operands = 0 : i64, tpu.core_type = #tpu.core_type<tc>, window_params = [{pipeline_mode = #tpu.pipeline_mode<synchronous>, transform_indices = @transform_0, window_bounds = array<i64: 8, 24>}, {pipeline_mode = #tpu.pipeline_mode<synchronous>, transform_indices = @transform_1, window_bounds = array<i64: 768, 128>}, {pipeline_mode = #tpu.pipeline_mode<synchronous>, transform_indices = @transform_2, window_bounds = array<i64: 8, 768>}, {transform_indices = @transform_3, window_bounds = array<i64: 2>}, {pipeline_mode = #tpu.pipeline_mode<synchronous>, transform_indices = @transform_4, window_bounds = array<i64: 4, 6>}]} {
    %c0 = arith.constant 0 : index
    %c0_0 = arith.constant 0 : index
    %0 = vector.load %arg1[%c0, %c0_0] : memref<8x24xi32, #tpu.memory_space<vmem>>, vector<1x24xi32>
    %c1 = arith.constant 1 : index
    %c0_1 = arith.constant 0 : index
    %1 = vector.load %arg1[%c1, %c0_1] : memref<8x24xi32, #tpu.memory_space<vmem>>, vector<1x24xi32>
    %c2 = arith.constant 2 : index
    %c0_2 = arith.constant 0 : index
    %2 = vector.load %arg1[%c2, %c0_2] : memref<8x24xi32, #tpu.memory_space<vmem>>, vector<1x24xi32>
    %3 = arith.sitofp %2 : vector<1x24xi32> to vector<1x24xf32>
    %4 = tpu.iota {dimensions = array<i32: 0>} : vector<128x24xi32>
    %5 = vector.broadcast %0 : vector<1x24xi32> to vector<128x24xi32>
    %6 = arith.cmpi eq, %4, %5 : vector<128x24xi32>
    %7 = vector.broadcast %1 : vector<1x24xi32> to vector<128x24xi32>
    %8 = arith.cmpi eq, %4, %7 : vector<128x24xi32>
    %9 = arith.ori %6, %8 : vector<128x24xi1>
    %cst = arith.constant 0.000000e+00 : f32
    %10 = vector.shape_cast %3 : vector<1x24xf32> to vector<1x24xf32>
    %11 = vector.broadcast %10 : vector<1x24xf32> to vector<128x24xf32>
    %12 = vector.broadcast %cst : f32 to vector<128x24xf32>
    %13 = arith.select %9, %11, %12 : vector<128x24xi1>, vector<128x24xf32>
    %14 = arith.truncf %13 : vector<128x24xf32> to vector<128x24xbf16>
    %c0_3 = arith.constant 0 : index
    %c0_4 = arith.constant 0 : index
    %15 = vector.load %arg2[%c0_3, %c0_4] : memref<768x128xbf16, #tpu.memory_space<vmem>>, vector<768x128xbf16>
    %cst_5 = arith.constant dense<0.000000e+00> : vector<768x24xf32>
    %16 = tpu.matmul %15, %14, %cst_5 {dimension_numbers = #tpu.dot_dimension_numbers<[1], [0], [0], [1], [0, 0, 1, 1], [], []>} : vector<768x128xbf16>, vector<128x24xbf16>, vector<768x24xf32> -> vector<768x24xf32>
    %c0_6 = arith.constant 0 : index
    %c0_7 = arith.constant 0 : index
    %17 = vector.load %arg3[%c0_6, %c0_7] : memref<8x768xbf16, #tpu.memory_space<vmem>>, vector<8x768xbf16>
    %18 = arith.truncf %16 : vector<768x24xf32> to vector<768x24xbf16>
    %cst_8 = arith.constant dense<0.000000e+00> : vector<8x24xf32>
    %19 = tpu.matmul %17, %18, %cst_8 {dimension_numbers = #tpu.dot_dimension_numbers<[1], [0], [0], [1], [0, 0, 1, 1], [], []>} : vector<8x768xbf16>, vector<768x24xbf16>, vector<8x24xf32> -> vector<8x24xf32>
    %20 = vector.extract_strided_slice %19 {offsets = [0, 0], sizes = [1, 6], strides = [1, 1]} : vector<8x24xf32> to vector<1x6xf32>
    %21 = vector.extract_strided_slice %19 {offsets = [0, 6], sizes = [1, 6], strides = [1, 1]} : vector<8x24xf32> to vector<1x6xf32>
    %22 = vector.extract_strided_slice %19 {offsets = [1, 12], sizes = [1, 6], strides = [1, 1]} : vector<8x24xf32> to vector<1x6xf32>
    %23 = vector.extract_strided_slice %19 {offsets = [1, 18], sizes = [1, 6], strides = [1, 1]} : vector<8x24xf32> to vector<1x6xf32>
    %24 = tpu.concatenate %20, %21 in 0 : vector<1x6xf32>, vector<1x6xf32> -> vector<2x6xf32>
    %c0_9 = arith.constant 0 : index
    %25 = memref.load %arg4[%c0_9] : memref<2xf32, #tpu.memory_space<smem>>
    %26 = vector.broadcast %25 : f32 to vector<2x6xf32>
    %27 = arith.addf %24, %26 : vector<2x6xf32>
    %28 = tpu.concatenate %22, %23 in 0 : vector<1x6xf32>, vector<1x6xf32> -> vector<2x6xf32>
    %c1_10 = arith.constant 1 : index
    %29 = memref.load %arg4[%c1_10] : memref<2xf32, #tpu.memory_space<smem>>
    %30 = vector.broadcast %29 : f32 to vector<2x6xf32>
    %31 = arith.addf %28, %30 : vector<2x6xf32>
    %cst_11 = arith.constant dense<0xFF800000> : vector<2xf32>
    %32 = vector.multi_reduction <maximumf>, %27, %cst_11 [1] : vector<2x6xf32> to vector<2xf32>
    %33 = vector.shape_cast %32 : vector<2xf32> to vector<2x1xf32>
    %34 = vector.broadcast %33 : vector<2x1xf32> to vector<2x6xf32>
    %35 = arith.subf %27, %34 : vector<2x6xf32>
    %36 = math.exp %35 : vector<2x6xf32>
    %cst_12 = arith.constant dense<0.000000e+00> : vector<2xf32>
    %37 = vector.multi_reduction <add>, %36, %cst_12 [1] : vector<2x6xf32> to vector<2xf32>
    %38 = vector.shape_cast %37 : vector<2xf32> to vector<2x1xf32>
    %39 = math.log %38 : vector<2x1xf32>
    %40 = vector.broadcast %39 : vector<2x1xf32> to vector<2x6xf32>
    %41 = arith.subf %35, %40 : vector<2x6xf32>
    %cst_13 = arith.constant dense<0xFF800000> : vector<2xf32>
    %42 = vector.multi_reduction <maximumf>, %31, %cst_13 [1] : vector<2x6xf32> to vector<2xf32>
    %43 = vector.shape_cast %42 : vector<2xf32> to vector<2x1xf32>
    %44 = vector.broadcast %43 : vector<2x1xf32> to vector<2x6xf32>
    %45 = arith.subf %31, %44 : vector<2x6xf32>
    %46 = math.exp %45 : vector<2x6xf32>
    %cst_14 = arith.constant dense<0.000000e+00> : vector<2xf32>
    %47 = vector.multi_reduction <add>, %46, %cst_14 [1] : vector<2x6xf32> to vector<2xf32>
    %48 = vector.shape_cast %47 : vector<2xf32> to vector<2x1xf32>
    %49 = math.log %48 : vector<2x1xf32>
    %50 = vector.broadcast %49 : vector<2x1xf32> to vector<2x6xf32>
    %51 = arith.subf %45, %50 : vector<2x6xf32>
    %52 = tpu.concatenate %41, %51 in 0 : vector<2x6xf32>, vector<2x6xf32> -> vector<4x6xf32>
    %c0_15 = arith.constant 0 : index
    %c0_16 = arith.constant 0 : index
    %53 = vector.load %arg5[%c0_15, %c0_16] : memref<4x6xf32, #tpu.memory_space<vmem>>, vector<4x6xf32>
    tpu.vector_store %arg5[%c0_15, %c0_16], %52 {strides = array<i32>} : memref<4x6xf32, #tpu.memory_space<vmem>>, vector<4x6xf32>,
    return
  }
  func.func @transform_0(%arg0: i32) -> (i32, i32) {
    %c0_i32 = arith.constant 0 : i32
    %c0_i32_0 = arith.constant 0 : i32
    %c0_i32_1 = arith.constant 0 : i32
    return %c0_i32, %c0_i32_0 : i32, i32
  }
  func.func @transform_1(%arg0: i32) -> (i32, i32) {
    %c0_i32 = arith.constant 0 : i32
    %c0_i32_0 = arith.constant 0 : i32
    %c0_i32_1 = arith.constant 0 : i32
    return %c0_i32, %c0_i32_0 : i32, i32
  }
  func.func @transform_2(%arg0: i32) -> (i32, i32) {
    %c0_i32 = arith.constant 0 : i32
    %c0_i32_0 = arith.constant 0 : i32
    %c0_i32_1 = arith.constant 0 : i32
    return %c0_i32, %c0_i32_0 : i32, i32
  }
  func.func @transform_3(%arg0: i32) -> i32 {
    %c0_i32 = arith.constant 0 : i32
    %c0_i32_0 = arith.constant 0 : i32
    return %c0_i32 : i32
  }
  func.func @transform_4(%arg0: i32) -> (i32, i32) {
    %c0_i32 = arith.constant 0 : i32
    %c0_i32_0 = arith.constant 0 : i32
    %c0_i32_1 = arith.constant 0 : i32
    return %c0_i32, %c0_i32_0 : i32, i32
  }
}

</mosaic_0001>

<llo_original>
// kernel: tpu_custom_call.1
$region0: #{tpu_custom_call.1}
  #allocation0 [shape = 'u32[]', space=smem, size = 0x4, offset = 0x4, fixed_abs, tag = 'smem constant byte address 0x4 - core index']
  #allocation1 [shape = 'u32[144,128]{1,0:T(1,128)}', space=vmem, size = 0x12000, scoped, tag = 'internal scratch']
  %s0 = inlined_call_operand.hbm [shape: s32[8,24], index: 0, kind: input, shape index: {}]
  %s1 = inlined_call_operand.hbm [shape: bf16[768,128], index: 1, kind: input, shape index: {}]
  %s2 = inlined_call_operand.hbm [shape: bf16[8,768], index: 2, kind: input, shape index: {}]
  %s3 = inlined_call_operand.vmem [shape: f32[2], index: 3, kind: input, shape index: {}]
  %s4 = inlined_call_operand.hbm [shape: f32[4,6], index: 4, kind: output, shape index: {}]
  %s5 = sld [smem:[#allocation0]]
  $region42: #{tpu_custom_call.1} parent=0
    _
  %s7 = ssub.s32 1, %s5
  %s8 = scalar_select 0, %s7, %s5
  $region1: #{tpu_custom_call.1} parent=0
    #allocation2 [shape = 'u8[4096]{0}', space=vmem, size = 0x1000, scoped, tag = 'input window, operand 0, single buffered']
    #allocation3 [shape = 's32[1]{0}', space=sflag, size = 0x4, scoped, tag = 'scoped memory for tpu_custom_call.1']
    #allocation4 [shape = 's32[1]{0}', space=sflag, size = 0x4, scoped, tag = 'scoped memory for tpu_custom_call.1']
    #allocation5 [shape = 's32[1]{0}', space=sflag, size = 0x4, scoped, tag = 'scoped memory for tpu_custom_call.1']
    #allocation6 [shape = 'u8[196608]{0}', space=vmem, size = 0x30000, scoped, tag = 'input window, operand 1, single buffered']
    #allocation7 [shape = 's32[1]{0}', space=sflag, size = 0x4, scoped, tag = 'scoped memory for tpu_custom_call.1']
    #allocation8 [shape = 'u8[12288]{0}', space=vmem, size = 0x3000, scoped, tag = 'input window, operand 2, single buffered']
    #allocation9 [shape = 'u8[512]{0}', space=smem, size = 0x200, scoped, tag = 'input window, operand 3, single buffered']
    #allocation10 [shape = 'u8[2048]{0}', space=vmem, size = 0x800, scoped, tag = 'output window, operand 0, single buffered']
    %9 = vsyncpa [#allocation3], 0
    %10 = vsyncpa [#allocation7], 0
    %11 = vsyncpa [#allocation5], 0
    %12 = vsyncpa [#allocation4], 0
    // Predicated region
    $region2: #{tpu_custom_call.1} parent=1 // pred_check
      _
    $region3: #{tpu_custom_call.1} parent=1 // pred_check_branch
      %14 = sbr.rel (0) target = $region5
    $region4: #{tpu_custom_call.1} parent=1 // pred_region
      %s16 = ssub.s32 128, 128
      %17 = vsyncadd [#allocation3], %s16
      %s19 = sshll.u32 [#allocation2], 4
      %s20 = int_to_ptr.vmem [resolvable:$true] %s19
      %22 = dma.hbm_to_vmem [thread:$0]  %s0, 128, %s20, [#allocation3]
    $region5: #{tpu_custom_call.1} parent=1 // pred_fallthru
      _
    // Predicated region
    $region6: #{tpu_custom_call.1} parent=1 // pred_check
      _
    $region7: #{tpu_custom_call.1} parent=1 // pred_check_branch
      %24 = sbr.rel (0) target = $region9
    $region8: #{tpu_custom_call.1} parent=1 // pred_region
      %s26 = ssub.s32 6144, 6144
      %27 = vsyncadd [#allocation7], %s26
      %s28 = sshll.u32 [#allocation6], 4
      %s29 = int_to_ptr.vmem [resolvable:$true] %s28
      %34 = dma.hbm_to_vmem [thread:$0]  %s1, 6144, %s29, [#allocation7], 64, 64, 4
    $region9: #{tpu_custom_call.1} parent=1 // pred_fallthru
      _
    // Predicated region
    $region10: #{tpu_custom_call.1} parent=1 // pred_check
      _
    $region11: #{tpu_custom_call.1} parent=1 // pred_check_branch
      %36 = sbr.rel (0) target = $region13
    $region12: #{tpu_custom_call.1} parent=1 // pred_region
      %s38 = ssub.s32 384, 384
      %39 = vsyncadd [#allocation7], %s38
      %s41 = sshll.u32 [#allocation8], 4
      %s42 = int_to_ptr.vmem [resolvable:$true] %s41
      %44 = dma.hbm_to_vmem [thread:$0]  %s2, 384, %s42, [#allocation7]
    $region13: #{tpu_custom_call.1} parent=1 // pred_fallthru
      _
    // Predicated region
    $region14: #{tpu_custom_call.1} parent=1 // pred_check
      _
    $region15: #{tpu_custom_call.1} parent=1 // pred_check_branch
      %46 = sbr.rel (0) target = $region17
    $region16: #{tpu_custom_call.1} parent=1 // pred_region
      %s48 = ssub.s32 16, 16
      %49 = vsyncadd [#allocation5], %s48
      %s51 = sshll.u32 %s3, 4
      %s52 = int_to_ptr.vmem [resolvable:$true] %s51
      %54 = dma.vmem_to_smem %s52, 16, [#allocation9], [#allocation5]
    $region17: #{tpu_custom_call.1} parent=1 // pred_fallthru
      _
    // Predicated region
    $region18: #{tpu_custom_call.1} parent=1 // pred_check
      _
    $region19: #{tpu_custom_call.1} parent=1 // pred_check_branch
      %56 = sbr.rel (0) target = $region21
    $region20: #{tpu_custom_call.1} parent=1 // pred_region
      %57 = dma.done [#allocation3], 128
    $region21: #{tpu_custom_call.1} parent=1 // pred_fallthru
      _
    // Predicated region
    $region22: #{tpu_custom_call.1} parent=1 // pred_check
      _
    $region23: #{tpu_custom_call.1} parent=1 // pred_check_branch
      %59 = sbr.rel (0) target = $region25
    $region24: #{tpu_custom_call.1} parent=1 // pred_region
      %60 = dma.done [#allocation7], 6144
    $region25: #{tpu_custom_call.1} parent=1 // pred_fallthru
      _
    // Predicated region
    $region26: #{tpu_custom_call.1} parent=1 // pred_check
      _
    $region27: #{tpu_custom_call.1} parent=1 // pred_check_branch
      %62 = sbr.rel (0) target = $region29
    $region28: #{tpu_custom_call.1} parent=1 // pred_region
      %63 = dma.done [#allocation7], 384
    $region29: #{tpu_custom_call.1} parent=1 // pred_fallthru
      _
    // Predicated region
    $region30: #{tpu_custom_call.1} parent=1 // pred_check
      _
    $region31: #{tpu_custom_call.1} parent=1 // pred_check_branch
      %65 = sbr.rel (0) target = $region33
    $region32: #{tpu_custom_call.1} parent=1 // pred_region
      %66 = dma.done [#allocation5], 16
    $region33: #{tpu_custom_call.1} parent=1 // pred_fallthru
      _
    %67 = sfence
    %v69 = vld [vmem:[#allocation2] sm:$0x1]
    %v70 = vld [vmem:[#allocation2 + $0x1] sm:$0x1]
    %v71 = vld [vmem:[#allocation2 + $0x2] sm:$0x1]
    %v72 = vcvt.s32.f32 %v71
    %v73 = vlaneseq
    %v74 = vshrl.u32 %v73, 7
    %v75 = vadd.s32 %v74, 8
    %v76 = vadd.s32 %v74, 16
    %v77 = vadd.s32 %v74, 24
    %v78 = vadd.s32 %v74, 32
    %v79 = vadd.s32 %v74, 40
    %v80 = vadd.s32 %v74, 48
    %v81 = vadd.s32 %v74, 56
    %v82 = vadd.s32 %v74, 64
    %v83 = vadd.s32 %v74, 72
    %v84 = vadd.s32 %v74, 80
    %v85 = vadd.s32 %v74, 88
    %v86 = vadd.s32 %v74, 96
    %v87 = vadd.s32 %v74, 104
    %v88 = vadd.s32 %v74, 112
    %v89 = vadd.s32 %v74, 120
    %v90 = vlaneseq
    %v91 = vshrl.u32 %v90, 7
    %v92 = vsub.s32 0, %v91
    %v93 = vrot.slane %v69, %v92
    %vm94 = vcmp.eq.s32.totalorder %v74, %v93
    %vm95 = vcmp.eq.s32.totalorder %v75, %v93
    %vm96 = vcmp.eq.s32.totalorder %v76, %v93
    %vm97 = vcmp.eq.s32.totalorder %v77, %v93
    %vm98 = vcmp.eq.s32.totalorder %v78, %v93
    %vm99 = vcmp.eq.s32.totalorder %v79, %v93
    %vm100 = vcmp.eq.s32.totalorder %v80, %v93
    %vm101 = vcmp.eq.s32.totalorder %v81, %v93
    %vm102 = vcmp.eq.s32.totalorder %v82, %v93
    %vm103 = vcmp.eq.s32.totalorder %v83, %v93
    %vm104 = vcmp.eq.s32.totalorder %v84, %v93
    %vm105 = vcmp.eq.s32.totalorder %v85, %v93
    %vm106 = vcmp.eq.s32.totalorder %v86, %v93
    %vm107 = vcmp.eq.s32.totalorder %v87, %v93
    %vm108 = vcmp.eq.s32.totalorder %v88, %v93
    %vm109 = vcmp.eq.s32.totalorder %v89, %v93
    %v110 = vlaneseq
    %v111 = vshrl.u32 %v110, 7
    %v112 = vsub.s32 0, %v111
    %v113 = vrot.slane %v70, %v112
    %vm114 = vcmp.eq.s32.totalorder %v74, %v113
    %vm115 = vcmp.eq.s32.totalorder %v75, %v113
    %vm116 = vcmp.eq.s32.totalorder %v76, %v113
    %vm117 = vcmp.eq.s32.totalorder %v77, %v113
    %vm118 = vcmp.eq.s32.totalorder %v78, %v113
    %vm119 = vcmp.eq.s32.totalorder %v79, %v113
    %vm120 = vcmp.eq.s32.totalorder %v80, %v113
    %vm121 = vcmp.eq.s32.totalorder %v81, %v113
    %vm122 = vcmp.eq.s32.totalorder %v82, %v113
    %vm123 = vcmp.eq.s32.totalorder %v83, %v113
    %vm124 = vcmp.eq.s32.totalorder %v84, %v113
    %vm125 = vcmp.eq.s32.totalorder %v85, %v113
    %vm126 = vcmp.eq.s32.totalorder %v86, %v113
    %vm127 = vcmp.eq.s32.totalorder %v87, %v113
    %vm128 = vcmp.eq.s32.totalorder %v88, %v113
    %vm129 = vcmp.eq.s32.totalorder %v89, %v113
    %vm130 = vmor %vm94, %vm114
    %vm131 = vmor %vm95, %vm115
    %vm132 = vmor %vm96, %vm116
    %vm133 = vmor %vm97, %vm117
    %vm134 = vmor %vm98, %vm118
    %vm135 = vmor %vm99, %vm119
    %vm136 = vmor %vm100, %vm120
    %vm137 = vmor %vm101, %vm121
    %vm138 = vmor %vm102, %vm122
    %vm139 = vmor %vm103, %vm123
    %vm140 = vmor %vm104, %vm124
    %vm141 = vmor %vm105, %vm125
    %vm142 = vmor %vm106, %vm126
    %vm143 = vmor %vm107, %vm127
    %vm144 = vmor %vm108, %vm128
    %vm145 = vmor %vm109, %vm129
    %v146 = vlaneseq
    %v147 = vshrl.u32 %v146, 7
    %v148 = vsub.s32 0, %v147
    %v149 = vrot.slane %v72, %v148
    %v150 = vsel %vm130, %v149, 0.0
    %v151 = vsel %vm131, %v149, 0.0
    %v152 = vsel %vm132, %v149, 0.0
    %v153 = vsel %vm133, %v149, 0.0
    %v154 = vsel %vm134, %v149, 0.0
    %v155 = vsel %vm135, %v149, 0.0
    %v156 = vsel %vm136, %v149, 0.0
    %v157 = vsel %vm137, %v149, 0.0
    %v158 = vsel %vm138, %v149, 0.0
    %v159 = vsel %vm139, %v149, 0.0
    %v160 = vsel %vm140, %v149, 0.0
    %v161 = vsel %vm141, %v149, 0.0
    %v162 = vsel %vm142, %v149, 0.0
    %v163 = vsel %vm143, %v149, 0.0
    %v164 = vsel %vm144, %v149, 0.0
    %v165 = vsel %vm145, %v149, 0.0
    %v166 = vpack.c.bf16 %v151, %v150
    %v167 = vpack.c.bf16 %v153, %v152
    %v168 = vpack.c.bf16 %v155, %v154
    %v169 = vpack.c.bf16 %v157, %v156
    %v170 = vpack.c.bf16 %v159, %v158
    %v171 = vpack.c.bf16 %v161, %v160
    %v172 = vpack.c.bf16 %v163, %v162
    %v173 = vpack.c.bf16 %v165, %v164
    %v174 = vld [vmem:[#allocation6] sm:$0xf]
    %v175 = vld [vmem:[#allocation6 + $0x4] sm:$0xf]
    %v176 = vld [vmem:[#allocation6 + $0x8] sm:$0xf]
    %v177 = vld [vmem:[#allocation6 + $0xc] sm:$0xf]
    %v178 = vld [vmem:[#allocation6 + $0x10] sm:$0xf]
    %v179 = vld [vmem:[#allocation6 + $0x14] sm:$0xf]
    %v180 = vld [vmem:[#allocation6 + $0x18] sm:$0xf]
    %v181 = vld [vmem:[#allocation6 + $0x1c] sm:$0xf]
    %v182 = vld [vmem:[#allocation6 + $0x20] sm:$0xf]
    %v183 = vld [vmem:[#allocation6 + $0x24] sm:$0xf]
    %v184 = vld [vmem:[#allocation6 + $0x28] sm:$0xf]
    %v185 = vld [vmem:[#allocation6 + $0x2c] sm:$0xf]
    %v186 = vld [vmem:[#allocation6 + $0x30] sm:$0xf]
    %v187 = vld [vmem:[#allocation6 + $0x34] sm:$0xf]
    %v188 = vld [vmem:[#allocation6 + $0x38] sm:$0xf]
    %v189 = vld [vmem:[#allocation6 + $0x3c] sm:$0xf]
    %v190 = vld [vmem:[#allocation6 + $0x40] sm:$0xf]
    %v191 = vld [vmem:[#allocation6 + $0x44] sm:$0xf]
    %v192 = vld [vmem:[#allocation6 + $0x48] sm:$0xf]
    %v193 = vld [vmem:[#allocation6 + $0x4c] sm:$0xf]
    %v194 = vld [vmem:[#allocation6 + $0x50] sm:$0xf]
    %v195 = vld [vmem:[#allocation6 + $0x54] sm:$0xf]
    %v196 = vld [vmem:[#allocation6 + $0x58] sm:$0xf]
    %v197 = vld [vmem:[#allocation6 + $0x5c] sm:$0xf]
    %v198 = vld [vmem:[#allocation6 + $0x60] sm:$0xf]
    %v199 = vld [vmem:[#allocation6 + $0x64] sm:$0xf]
    %v200 = vld [vmem:[#allocation6 + $0x68] sm:$0xf]
    %v201 = vld [vmem:[#allocation6 + $0x6c] sm:$0xf]
    %v202 = vld [vmem:[#allocation6 + $0x70] sm:$0xf]
    %v203 = vld [vmem:[#allocation6 + $0x74] sm:$0xf]
    %v204 = vld [vmem:[#allocation6 + $0x78] sm:$0xf]
    %v205 = vld [vmem:[#allocation6 + $0x7c] sm:$0xf]
    %v206 = vld [vmem:[#allocation6 + $0x80] sm:$0xf]
    %v207 = vld [vmem:[#allocation6 + $0x84] sm:$0xf]
    %v208 = vld [vmem:[#allocation6 + $0x88] sm:$0xf]
    %v209 = vld [vmem:[#allocation6 + $0x8c] sm:$0xf]
    %v210 = vld [vmem:[#allocation6 + $0x90] sm:$0xf]
    %v211 = vld [vmem:[#allocation6 + $0x94] sm:$0xf]
    %v212 = vld [vmem:[#allocation6 + $0x98] sm:$0xf]
    %v213 = vld [vmem:[#allocation6 + $0x9c] sm:$0xf]
    %v214 = vld [vmem:[#allocation6 + $0xa0] sm:$0xf]
    %v215 = vld [vmem:[#allocation6 + $0xa4] sm:$0xf]
    %v216 = vld [vmem:[#allocation6 + $0xa8] sm:$0xf]
    %v217 = vld [vmem:[#allocation6 + $0xac] sm:$0xf]
    %v218 = vld [vmem:[#allocation6 + $0xb0] sm:$0xf]
    %v219 = vld [vmem:[#allocation6 + $0xb4] sm:$0xf]
    %v220 = vld [vmem:[#allocation6 + $0xb8] sm:$0xf]
    %v221 = vld [vmem:[#allocation6 + $0xbc] sm:$0xf]
    %v222 = vld [vmem:[#allocation6 + $0xc0] sm:$0xf]
    %v223 = vld [vmem:[#allocation6 + $0xc4] sm:$0xf]
    %v224 = vld [vmem:[#allocation6 + $0xc8] sm:$0xf]
    %v225 = vld [vmem:[#allocation6 + $0xcc] sm:$0xf]
    %v226 = vld [vmem:[#allocation6 + $0xd0] sm:$0xf]
    %v227 = vld [vmem:[#allocation6 + $0xd4] sm:$0xf]
    %v228 = vld [vmem:[#allocation6 + $0xd8] sm:$0xf]
    %v229 = vld [vmem:[#allocation6 + $0xdc] sm:$0xf]
    %v230 = vld [vmem:[#allocation6 + $0xe0] sm:$0xf]
    %v231 = vld [vmem:[#allocation6 + $0xe4] sm:$0xf]
    %v232 = vld [vmem:[#allocation6 + $0xe8] sm:$0xf]
    %v233 = vld [vmem:[#allocation6 + $0xec] sm:$0xf]
    %v234 = vld [vmem:[#allocation6 + $0xf0] sm:$0xf]
    %v235 = vld [vmem:[#allocation6 + $0xf4] sm:$0xf]
    %v236 = vld [vmem:[#allocation6 + $0xf8] sm:$0xf]
    %v237 = vld [vmem:[#allocation6 + $0xfc] sm:$0xf]
    %v238 = vld [vmem:[#allocation6 + $0x100] sm:$0xf]
    %v239 = vld [vmem:[#allocation6 + $0x104] sm:$0xf]
    %v240 = vld [vmem:[#allocation6 + $0x108] sm:$0xf]
    %v241 = vld [vmem:[#allocation6 + $0x10c] sm:$0xf]
    %v242 = vld [vmem:[#allocation6 + $0x110] sm:$0xf]
    %v243 = vld [vmem:[#allocation6 + $0x114] sm:$0xf]
    %v244 = vld [vmem:[#allocation6 + $0x118] sm:$0xf]
    %v245 = vld [vmem:[#allocation6 + $0x11c] sm:$0xf]
    %v246 = vld [vmem:[#allocation6 + $0x120] sm:$0xf]
    %v247 = vld [vmem:[#allocation6 + $0x124] sm:$0xf]
    %v248 = vld [vmem:[#allocation6 + $0x128] sm:$0xf]
    %v249 = vld [vmem:[#allocation6 + $0x12c] sm:$0xf]
    %v250 = vld [vmem:[#allocation6 + $0x130] sm:$0xf]
    %v251 = vld [vmem:[#allocation6 + $0x134] sm:$0xf]
    %v252 = vld [vmem:[#allocation6 + $0x138] sm:$0xf]
    %v253 = vld [vmem:[#allocation6 + $0x13c] sm:$0xf]
    %v254 = vld [vmem:[#allocation6 + $0x140] sm:$0xf]
    %v255 = vld [vmem:[#allocation6 + $0x144] sm:$0xf]
    %v256 = vld [vmem:[#allocation6 + $0x148] sm:$0xf]
    %v257 = vld [vmem:[#allocation6 + $0x14c] sm:$0xf]
    %v258 = vld [vmem:[#allocation6 + $0x150] sm:$0xf]
    %v259 = vld [vmem:[#allocation6 + $0x154] sm:$0xf]
    %v260 = vld [vmem:[#allocation6 + $0x158] sm:$0xf]
    %v261 = vld [vmem:[#allocation6 + $0x15c] sm:$0xf]
    %v262 = vld [vmem:[#allocation6 + $0x160] sm:$0xf]
    %v263 = vld [vmem:[#allocation6 + $0x164] sm:$0xf]
    %v264 = vld [vmem:[#allocation6 + $0x168] sm:$0xf]
    %v265 = vld [vmem:[#allocation6 + $0x16c] sm:$0xf]
    %v266 = vld [vmem:[#allocation6 + $0x170] sm:$0xf]
    %v267 = vld [vmem:[#allocation6 + $0x174] sm:$0xf]
    %v268 = vld [vmem:[#allocation6 + $0x178] sm:$0xf]
    %v269 = vld [vmem:[#allocation6 + $0x17c] sm:$0xf]
    %v366 = vunpack.c.l.b16 %v174
    %v367 = vunpack.c.l.b16 %v175
    %v368 = vunpack.c.l.b16 %v176
    %v369 = vunpack.c.l.b16 %v177
    %v370 = vunpack.c.l.b16 %v178
    %v371 = vunpack.c.l.b16 %v179
    %v372 = vunpack.c.l.b16 %v180
    %v373 = vunpack.c.l.b16 %v181
    %v374 = vunpack.c.l.b16 %v182
    %v375 = vunpack.c.l.b16 %v183
    %v376 = vunpack.c.l.b16 %v184
    %v377 = vunpack.c.l.b16 %v185
    %v378 = vunpack.c.l.b16 %v186
    %v379 = vunpack.c.l.b16 %v187
    %v380 = vunpack.c.l.b16 %v188
    %v381 = vunpack.c.l.b16 %v189
    %v382 = vunpack.c.l.b16 %v190
    %v383 = vunpack.c.l.b16 %v191
    %v384 = vunpack.c.l.b16 %v192
    %v385 = vunpack.c.l.b16 %v193
    %v386 = vunpack.c.l.b16 %v194
    %v387 = vunpack.c.l.b16 %v195
    %v388 = vunpack.c.l.b16 %v196
    %v389 = vunpack.c.l.b16 %v197
    %v390 = vunpack.c.l.b16 %v198
    %v391 = vunpack.c.l.b16 %v199
    %v392 = vunpack.c.l.b16 %v200
    %v393 = vunpack.c.l.b16 %v201
    %v394 = vunpack.c.l.b16 %v202
    %v395 = vunpack.c.l.b16 %v203
    %v396 = vunpack.c.l.b16 %v204
    %v397 = vunpack.c.l.b16 %v205
    %v398 = vunpack.c.l.b16 %v206
    %v399 = vunpack.c.l.b16 %v207
    %v400 = vunpack.c.l.b16 %v208
    %v401 = vunpack.c.l.b16 %v209
    %v402 = vunpack.c.l.b16 %v210
    %v403 = vunpack.c.l.b16 %v211
    %v404 = vunpack.c.l.b16 %v212
    %v405 = vunpack.c.l.b16 %v213
    %v406 = vunpack.c.l.b16 %v214
    %v407 = vunpack.c.l.b16 %v215
    %v408 = vunpack.c.l.b16 %v216
    %v409 = vunpack.c.l.b16 %v217
    %v410 = vunpack.c.l.b16 %v218
    %v411 = vunpack.c.l.b16 %v219
    %v412 = vunpack.c.l.b16 %v220
    %v413 = vunpack.c.l.b16 %v221
    %v414 = vunpack.c.l.b16 %v222
    %v415 = vunpack.c.l.b16 %v223
    %v416 = vunpack.c.l.b16 %v224
    %v417 = vunpack.c.l.b16 %v225
    %v418 = vunpack.c.l.b16 %v226
    %v419 = vunpack.c.l.b16 %v227
    %v420 = vunpack.c.l.b16 %v228
    %v421 = vunpack.c.l.b16 %v229
    %v422 = vunpack.c.l.b16 %v230
    %v423 = vunpack.c.l.b16 %v231
    %v424 = vunpack.c.l.b16 %v232
    %v425 = vunpack.c.l.b16 %v233
    %v426 = vunpack.c.l.b16 %v234
    %v427 = vunpack.c.l.b16 %v235
    %v428 = vunpack.c.l.b16 %v236
    %v429 = vunpack.c.l.b16 %v237
    %v430 = vunpack.c.l.b16 %v238
    %v431 = vunpack.c.l.b16 %v239
    %v432 = vunpack.c.l.b16 %v240
    %v433 = vunpack.c.l.b16 %v241
    %v434 = vunpack.c.l.b16 %v242
    %v435 = vunpack.c.l.b16 %v243
    %v436 = vunpack.c.l.b16 %v244
    %v437 = vunpack.c.l.b16 %v245
    %v438 = vunpack.c.l.b16 %v246
    %v439 = vunpack.c.l.b16 %v247
    %v440 = vunpack.c.l.b16 %v248
    %v441 = vunpack.c.l.b16 %v249
    %v442 = vunpack.c.l.b16 %v250
    %v443 = vunpack.c.l.b16 %v251
    %v444 = vunpack.c.l.b16 %v252
    %v445 = vunpack.c.l.b16 %v253
    %v446 = vunpack.c.l.b16 %v254
    %v447 = vunpack.c.l.b16 %v255
    %v448 = vunpack.c.l.b16 %v256
    %v449 = vunpack.c.l.b16 %v257
    %v450 = vunpack.c.l.b16 %v258
    %v451 = vunpack.c.l.b16 %v259
    %v452 = vunpack.c.l.b16 %v260
    %v453 = vunpack.c.l.b16 %v261
    %v454 = vunpack.c.l.b16 %v262
    %v455 = vunpack.c.l.b16 %v263
    %v456 = vunpack.c.l.b16 %v264
    %v457 = vunpack.c.l.b16 %v265
    %v458 = vunpack.c.l.b16 %v266
    %v459 = vunpack.c.l.b16 %v267
    %v460 = vunpack.c.l.b16 %v268
    %v461 = vunpack.c.l.b16 %v269
    %v462 = vpack.c.b16 %v367, %v366
    %v463 = vpack.c.b16 %v369, %v368
    %v464 = vpack.c.b16 %v371, %v370
    %v465 = vpack.c.b16 %v373, %v372
    %v466 = vpack.c.b16 %v375, %v374
    %v467 = vpack.c.b16 %v377, %v376
    %v468 = vpack.c.b16 %v379, %v378
    %v469 = vpack.c.b16 %v381, %v380
    %v470 = vpack.c.b16 %v383, %v382
    %v471 = vpack.c.b16 %v385, %v384
    %v472 = vpack.c.b16 %v387, %v386
    %v473 = vpack.c.b16 %v389, %v388
    %v474 = vpack.c.b16 %v391, %v390
    %v475 = vpack.c.b16 %v393, %v392
    %v476 = vpack.c.b16 %v395, %v394
    %v477 = vpack.c.b16 %v397, %v396
    %v478 = vpack.c.b16 %v399, %v398
    %v479 = vpack.c.b16 %v401, %v400
    %v480 = vpack.c.b16 %v403, %v402
    %v481 = vpack.c.b16 %v405, %v404
    %v482 = vpack.c.b16 %v407, %v406
    %v483 = vpack.c.b16 %v409, %v408
    %v484 = vpack.c.b16 %v411, %v410
    %v485 = vpack.c.b16 %v413, %v412
    %v486 = vpack.c.b16 %v415, %v414
    %v487 = vpack.c.b16 %v417, %v416
    %v488 = vpack.c.b16 %v419, %v418
    %v489 = vpack.c.b16 %v421, %v420
    %v490 = vpack.c.b16 %v423, %v422
    %v491 = vpack.c.b16 %v425, %v424
    %v492 = vpack.c.b16 %v427, %v426
    %v493 = vpack.c.b16 %v429, %v428
    %v494 = vpack.c.b16 %v431, %v430
    %v495 = vpack.c.b16 %v433, %v432
    %v496 = vpack.c.b16 %v435, %v434
    %v497 = vpack.c.b16 %v437, %v436
    %v498 = vpack.c.b16 %v439, %v438
    %v499 = vpack.c.b16 %v441, %v440
    %v500 = vpack.c.b16 %v443, %v442
    %v501 = vpack.c.b16 %v445, %v444
    %v502 = vpack.c.b16 %v447, %v446
    %v503 = vpack.c.b16 %v449, %v448
    %v504 = vpack.c.b16 %v451, %v450
    %v505 = vpack.c.b16 %v453, %v452
    %v506 = vpack.c.b16 %v455, %v454
    %v507 = vpack.c.b16 %v457, %v456
    %v508 = vpack.c.b16 %v459, %v458
    %v509 = vpack.c.b16 %v461, %v460
    %558 = vmatprep.subr.bf16.mxu0 0
    %559 = vmatpush1.bf16.msra.mxu0 %v166
    %560 = vmatprep.subr.bf16.mxu0 0
    %561 = vmatpush1.bf16.msra.mxu0 %v167
    %562 = vmatprep.subr.bf16.mxu0 0
    %563 = vmatpush1.bf16.msra.mxu0 %v168
    %564 = vmatprep.subr.bf16.mxu0 0
    %565 = vmatpush1.bf16.msra.mxu0 %v169
    %566 = vmatprep.subr.bf16.mxu0 0
    %567 = vmatpush1.bf16.msra.mxu0 %v170
    %568 = vmatprep.subr.bf16.mxu0 0
    %569 = vmatpush1.bf16.msra.mxu0 %v171
    %570 = vmatprep.subr.bf16.mxu0 0
    %571 = vmatpush1.bf16.msra.mxu0 %v172
    %572 = vmatprep.subr.bf16.mxu0 0
    %573 = vmatpush1.bf16.msra.mxu0 %v173
    %574 = vmatprep.subr.bf16.mxu0 0
    %575 = vmatpush1.bf16.msra.mxu0 0
    %576 = vmatprep.subr.bf16.mxu0 0
    %577 = vmatpush1.bf16.msra.mxu0 0
    %578 = vmatprep.subr.bf16.mxu0 0
    %579 = vmatpush1.bf16.msra.mxu0 0
    %580 = vmatprep.subr.bf16.mxu0 0
    %581 = vmatpush1.bf16.msra.mxu0 0
    %582 = vmatprep.subr.bf16.mxu0 0
    %583 = vmatpush1.bf16.msra.mxu0 0
    %584 = vmatprep.subr.bf16.mxu0 0
    %585 = vmatpush1.bf16.msra.mxu0 0
    %586 = vmatprep.subr.bf16.mxu0 0
    %587 = vmatpush1.bf16.msra.mxu0 0
    %588 = vmatprep.subr.bf16.mxu0 0
    %589 = vmatpush1.bf16.msra.mxu0 0
    %590 = vmatprep.mubr.bf16.mxu0 0
    %591 = vmatmul.mubr.bf16.gmra.mrb[0].mxu0 %v462
    %v592 = vpop.f32.mrb[0].mxu0
    %v593 = vadd.f32 0.0, %v592
    %v594 = vpop.f32.mrb[0].mxu0
    %v595 = vpop.f32.mrb[0].mxu0
    %v596 = vadd.f32 0.0, %v595
    %v597 = vpop.f32.mrb[0].mxu0
    %598 = vmatprep.mubr.bf16.mxu0 0
    %599 = vmatmul.mubr.bf16.gmra.mrb[0].mxu0 %v463
    %v600 = vpop.f32.mrb[0].mxu0
    %v601 = vadd.f32 0.0, %v600
    %v602 = vpop.f32.mrb[0].mxu0
    %v603 = vpop.f32.mrb[0].mxu0
    %v604 = vadd.f32 0.0, %v603
    %v605 = vpop.f32.mrb[0].mxu0
    %606 = vmatprep.mubr.bf16.mxu0 0
    %607 = vmatmul.mubr.bf16.gmra.mrb[0].mxu0 %v464
    %v608 = vpop.f32.mrb[0].mxu0
    %v609 = vadd.f32 0.0, %v608
    %v610 = vpop.f32.mrb[0].mxu0
    %v611 = vpop.f32.mrb[0].mxu0
    %v612 = vadd.f32 0.0, %v611
    %v613 = vpop.f32.mrb[0].mxu0
    %614 = vmatprep.mubr.bf16.mxu0 0
    %615 = vmatmul.mubr.bf16.gmra.mrb[0].mxu0 %v465
    %v616 = vpop.f32.mrb[0].mxu0
    %v617 = vadd.f32 0.0, %v616
    %v618 = vpop.f32.mrb[0].mxu0
    %v619 = vpop.f32.mrb[0].mxu0
    %v620 = vadd.f32 0.0, %v619
    %v621 = vpop.f32.mrb[0].mxu0
    %622 = vmatprep.mubr.bf16.mxu0 0
    %623 = vmatmul.mubr.bf16.gmra.mrb[0].mxu0 %v466
    %v624 = vpop.f32.mrb[0].mxu0
    %v625 = vadd.f32 0.0, %v624
    %v626 = vpop.f32.mrb[0].mxu0
    %v627 = vpop.f32.mrb[0].mxu0
    %v628 = vadd.f32 0.0, %v627
    %v629 = vpop.f32.mrb[0].mxu0
    %630 = vmatprep.mubr.bf16.mxu0 0
    %631 = vmatmul.mubr.bf16.gmra.mrb[0].mxu0 %v467
    %v632 = vpop.f32.mrb[0].mxu0
    %v633 = vadd.f32 0.0, %v632
    %v634 = vpop.f32.mrb[0].mxu0
    %v635 = vpop.f32.mrb[0].mxu0
    %v636 = vadd.f32 0.0, %v635
    %v637 = vpop.f32.mrb[0].mxu0
    %638 = vmatprep.mubr.bf16.mxu0 0
    %639 = vmatmul.mubr.bf16.gmra.mrb[0].mxu0 %v468
    %v640 = vpop.f32.mrb[0].mxu0
    %v641 = vadd.f32 0.0, %v640
    %v642 = vpop.f32.mrb[0].mxu0
    %v643 = vpop.f32.mrb[0].mxu0
    %v644 = vadd.f32 0.0, %v643
    %v645 = vpop.f32.mrb[0].mxu0
    %646 = vmatprep.mubr.bf16.mxu0 0
    %647 = vmatmul.mubr.bf16.gmra.mrb[0].mxu0 %v469
    %v648 = vpop.f32.mrb[0].mxu0
    %v649 = vadd.f32 0.0, %v648
    %v650 = vpop.f32.mrb[0].mxu0
    %v651 = vpop.f32.mrb[0].mxu0
    %v652 = vadd.f32 0.0, %v651
    %v653 = vpop.f32.mrb[0].mxu0
    %654 = vmatprep.mubr.bf16.mxu0 0
    %655 = vmatmul.mubr.bf16.gmra.mrb[0].mxu0 %v470
    %v656 = vpop.f32.mrb[0].mxu0
    %v657 = vadd.f32 0.0, %v656
    %v658 = vpop.f32.mrb[0].mxu0
    %v659 = vpop.f32.mrb[0].mxu0
    %v660 = vadd.f32 0.0, %v659
    %v661 = vpop.f32.mrb[0].mxu0
    %662 = vmatprep.mubr.bf16.mxu0 0
    %663 = vmatmul.mubr.bf16.gmra.mrb[0].mxu0 %v471
    %v664 = vpop.f32.mrb[0].mxu0
    %v665 = vadd.f32 0.0, %v664
    %v666 = vpop.f32.mrb[0].mxu0
    %v667 = vpop.f32.mrb[0].mxu0
    %v668 = vadd.f32 0.0, %v667
    %v669 = vpop.f32.mrb[0].mxu0
    %670 = vmatprep.mubr.bf16.mxu0 0
    %671 = vmatmul.mubr.bf16.gmra.mrb[0].mxu0 %v472
    %v672 = vpop.f32.mrb[0].mxu0
    %v673 = vadd.f32 0.0, %v672
    %v674 = vpop.f32.mrb[0].mxu0
    %v675 = vpop.f32.mrb[0].mxu0
    %v676 = vadd.f32 0.0, %v675
    %v677 = vpop.f32.mrb[0].mxu0
    %678 = vmatprep.mubr.bf16.mxu0 0
    %679 = vmatmul.mubr.bf16.gmra.mrb[0].mxu0 %v473
    %v680 = vpop.f32.mrb[0].mxu0
    %v681 = vadd.f32 0.0, %v680
    %v682 = vpop.f32.mrb[0].mxu0
    %v683 = vpop.f32.mrb[0].mxu0
    %v684 = vadd.f32 0.0, %v683
    %v685 = vpop.f32.mrb[0].mxu0
    %686 = vmatprep.mubr.bf16.mxu0 0
    %687 = vmatmul.mubr.bf16.gmra.mrb[0].mxu0 %v474
    %v688 = vpop.f32.mrb[0].mxu0
    %v689 = vadd.f32 0.0, %v688
    %v690 = vpop.f32.mrb[0].mxu0
    %v691 = vpop.f32.mrb[0].mxu0
    %v692 = vadd.f32 0.0, %v691
    %v693 = vpop.f32.mrb[0].mxu0
    %694 = vmatprep.mubr.bf16.mxu0 0
    %695 = vmatmul.mubr.bf16.gmra.mrb[0].mxu0 %v475
    %v696 = vpop.f32.mrb[0].mxu0
    %v697 = vadd.f32 0.0, %v696
    %v698 = vpop.f32.mrb[0].mxu0
    %v699 = vpop.f32.mrb[0].mxu0
    %v700 = vadd.f32 0.0, %v699
    %v701 = vpop.f32.mrb[0].mxu0
    %702 = vmatprep.mubr.bf16.mxu0 0
    %703 = vmatmul.mubr.bf16.gmra.mrb[0].mxu0 %v476
    %v704 = vpop.f32.mrb[0].mxu0
    %v705 = vadd.f32 0.0, %v704
    %v706 = vpop.f32.mrb[0].mxu0
    %v707 = vpop.f32.mrb[0].mxu0
    %v708 = vadd.f32 0.0, %v707
    %v709 = vpop.f32.mrb[0].mxu0
    %710 = vmatprep.mubr.bf16.mxu0 0
    %711 = vmatmul.mubr.bf16.gmra.mrb[0].mxu0 %v477
    %v712 = vpop.f32.mrb[0].mxu0
    %v713 = vadd.f32 0.0, %v712
    %v714 = vpop.f32.mrb[0].mxu0
    %v715 = vpop.f32.mrb[0].mxu0
    %v716 = vadd.f32 0.0, %v715
    %v717 = vpop.f32.mrb[0].mxu0
    %718 = vmatprep.mubr.bf16.mxu0 0
    %719 = vmatmul.mubr.bf16.gmra.mrb[0].mxu0 %v478
    %v720 = vpop.f32.mrb[0].mxu0
    %v721 = vadd.f32 0.0, %v720
    %v722 = vpop.f32.mrb[0].mxu0
    %v723 = vpop.f32.mrb[0].mxu0
    %v724 = vadd.f32 0.0, %v723
    %v725 = vpop.f32.mrb[0].mxu0
    %726 = vmatprep.mubr.bf16.mxu0 0
    %727 = vmatmul.mubr.bf16.gmra.mrb[0].mxu0 %v479
    %v728 = vpop.f32.mrb[0].mxu0
    %v729 = vadd.f32 0.0, %v728
    %v730 = vpop.f32.mrb[0].mxu0
    %v731 = vpop.f32.mrb[0].mxu0
    %v732 = vadd.f32 0.0, %v731
    %v733 = vpop.f32.mrb[0].mxu0
    %734 = vmatprep.mubr.bf16.mxu0 0
    %735 = vmatmul.mubr.bf16.gmra.mrb[0].mxu0 %v480
    %v736 = vpop.f32.mrb[0].mxu0
    %v737 = vadd.f32 0.0, %v736
    %v738 = vpop.f32.mrb[0].mxu0
    %v739 = vpop.f32.mrb[0].mxu0
    %v740 = vadd.f32 0.0, %v739
    %v741 = vpop.f32.mrb[0].mxu0
    %742 = vmatprep.mubr.bf16.mxu0 0
    %743 = vmatmul.mubr.bf16.gmra.mrb[0].mxu0 %v481
    %v744 = vpop.f32.mrb[0].mxu0
    %v745 = vadd.f32 0.0, %v744
    %v746 = vpop.f32.mrb[0].mxu0
    %v747 = vpop.f32.mrb[0].mxu0
    %v748 = vadd.f32 0.0, %v747
    %v749 = vpop.f32.mrb[0].mxu0
    %750 = vmatprep.mubr.bf16.mxu0 0
    %751 = vmatmul.mubr.bf16.gmra.mrb[0].mxu0 %v482
    %v752 = vpop.f32.mrb[0].mxu0
    %v753 = vadd.f32 0.0, %v752
    %v754 = vpop.f32.mrb[0].mxu0
    %v755 = vpop.f32.mrb[0].mxu0
    %v756 = vadd.f32 0.0, %v755
    %v757 = vpop.f32.mrb[0].mxu0
    %758 = vmatprep.mubr.bf16.mxu0 0
    %759 = vmatmul.mubr.bf16.gmra.mrb[0].mxu0 %v483
    %v760 = vpop.f32.mrb[0].mxu0
    %v761 = vadd.f32 0.0, %v760
    %v762 = vpop.f32.mrb[0].mxu0
    %v763 = vpop.f32.mrb[0].mxu0
    %v764 = vadd.f32 0.0, %v763
    %v765 = vpop.f32.mrb[0].mxu0
    %766 = vmatprep.mubr.bf16.mxu0 0
    %767 = vmatmul.mubr.bf16.gmra.mrb[0].mxu0 %v484
    %v768 = vpop.f32.mrb[0].mxu0
    %v769 = vadd.f32 0.0, %v768
    %v770 = vpop.f32.mrb[0].mxu0
    %v771 = vpop.f32.mrb[0].mxu0
    %v772 = vadd.f32 0.0, %v771
    %v773 = vpop.f32.mrb[0].mxu0
    %774 = vmatprep.mubr.bf16.mxu0 0
    %775 = vmatmul.mubr.bf16.gmra.mrb[0].mxu0 %v485
    %v776 = vpop.f32.mrb[0].mxu0
    %v777 = vadd.f32 0.0, %v776
    %v778 = vpop.f32.mrb[0].mxu0
    %v779 = vpop.f32.mrb[0].mxu0
    %v780 = vadd.f32 0.0, %v779
    %v781 = vpop.f32.mrb[0].mxu0
    %782 = vmatprep.mubr.bf16.mxu0 0
    %783 = vmatmul.mubr.bf16.gmra.mrb[0].mxu0 %v486
    %v784 = vpop.f32.mrb[0].mxu0
    %v785 = vadd.f32 0.0, %v784
    %v786 = vpop.f32.mrb[0].mxu0
    %v787 = vpop.f32.mrb[0].mxu0
    %v788 = vadd.f32 0.0, %v787
    %v789 = vpop.f32.mrb[0].mxu0
    %790 = vmatprep.mubr.bf16.mxu0 0
    %791 = vmatmul.mubr.bf16.gmra.mrb[0].mxu0 %v487
    %v792 = vpop.f32.mrb[0].mxu0
    %v793 = vadd.f32 0.0, %v792
    %v794 = vpop.f32.mrb[0].mxu0
    %v795 = vpop.f32.mrb[0].mxu0
    %v796 = vadd.f32 0.0, %v795
    %v797 = vpop.f32.mrb[0].mxu0
    %798 = vmatprep.mubr.bf16.mxu0 0
    %799 = vmatmul.mubr.bf16.gmra.mrb[0].mxu0 %v488
    %v800 = vpop.f32.mrb[0].mxu0
    %v801 = vadd.f32 0.0, %v800
    %v802 = vpop.f32.mrb[0].mxu0
    %v803 = vpop.f32.mrb[0].mxu0
    %v804 = vadd.f32 0.0, %v803
    %v805 = vpop.f32.mrb[0].mxu0
    %806 = vmatprep.mubr.bf16.mxu0 0
    %807 = vmatmul.mubr.bf16.gmra.mrb[0].mxu0 %v489
    %v808 = vpop.f32.mrb[0].mxu0
    %v809 = vadd.f32 0.0, %v808
    %v810 = vpop.f32.mrb[0].mxu0
    %v811 = vpop.f32.mrb[0].mxu0
    %v812 = vadd.f32 0.0, %v811
    %v813 = vpop.f32.mrb[0].mxu0
    %814 = vmatprep.mubr.bf16.mxu0 0
    %815 = vmatmul.mubr.bf16.gmra.mrb[0].mxu0 %v490
    %v816 = vpop.f32.mrb[0].mxu0
    %v817 = vadd.f32 0.0, %v816
    %v818 = vpop.f32.mrb[0].mxu0
    %v819 = vpop.f32.mrb[0].mxu0
    %v820 = vadd.f32 0.0, %v819
    %v821 = vpop.f32.mrb[0].mxu0
    %822 = vmatprep.mubr.bf16.mxu0 0
    %823 = vmatmul.mubr.bf16.gmra.mrb[0].mxu0 %v491
    %v824 = vpop.f32.mrb[0].mxu0
    %v825 = vadd.f32 0.0, %v824
    %v826 = vpop.f32.mrb[0].mxu0
    %v827 = vpop.f32.mrb[0].mxu0
    %v828 = vadd.f32 0.0, %v827
    %v829 = vpop.f32.mrb[0].mxu0
    %830 = vmatprep.mubr.bf16.mxu0 0
    %831 = vmatmul.mubr.bf16.gmra.mrb[0].mxu0 %v492
    %v832 = vpop.f32.mrb[0].mxu0
    %v833 = vadd.f32 0.0, %v832
    %v834 = vpop.f32.mrb[0].mxu0
    %v835 = vpop.f32.mrb[0].mxu0
    %v836 = vadd.f32 0.0, %v835
    %v837 = vpop.f32.mrb[0].mxu0
    %838 = vmatprep.mubr.bf16.mxu0 0
    %839 = vmatmul.mubr.bf16.gmra.mrb[0].mxu0 %v493
    %v840 = vpop.f32.mrb[0].mxu0
    %v841 = vadd.f32 0.0, %v840
    %v842 = vpop.f32.mrb[0].mxu0
    %v843 = vpop.f32.mrb[0].mxu0
    %v844 = vadd.f32 0.0, %v843
    %v845 = vpop.f32.mrb[0].mxu0
    %846 = vmatprep.mubr.bf16.mxu0 0
    %847 = vmatmul.mubr.bf16.gmra.mrb[0].mxu0 %v494
    %v848 = vpop.f32.mrb[0].mxu0
    %v849 = vadd.f32 0.0, %v848
    %v850 = vpop.f32.mrb[0].mxu0
    %v851 = vpop.f32.mrb[0].mxu0
    %v852 = vadd.f32 0.0, %v851
    %v853 = vpop.f32.mrb[0].mxu0
    %854 = vmatprep.mubr.bf16.mxu0 0
    %855 = vmatmul.mubr.bf16.gmra.mrb[0].mxu0 %v495
    %v856 = vpop.f32.mrb[0].mxu0
    %v857 = vadd.f32 0.0, %v856
    %v858 = vpop.f32.mrb[0].mxu0
    %v859 = vpop.f32.mrb[0].mxu0
    %v860 = vadd.f32 0.0, %v859
    %v861 = vpop.f32.mrb[0].mxu0
    %862 = vmatprep.mubr.bf16.mxu0 0
    %863 = vmatmul.mubr.bf16.gmra.mrb[0].mxu0 %v496
    %v864 = vpop.f32.mrb[0].mxu0
    %v865 = vadd.f32 0.0, %v864
    %v866 = vpop.f32.mrb[0].mxu0
    %v867 = vpop.f32.mrb[0].mxu0
    %v868 = vadd.f32 0.0, %v867
    %v869 = vpop.f32.mrb[0].mxu0
    %870 = vmatprep.mubr.bf16.mxu0 0
    %871 = vmatmul.mubr.bf16.gmra.mrb[0].mxu0 %v497
    %v872 = vpop.f32.mrb[0].mxu0
    %v873 = vadd.f32 0.0, %v872
    %v874 = vpop.f32.mrb[0].mxu0
    %v875 = vpop.f32.mrb[0].mxu0
    %v876 = vadd.f32 0.0, %v875
    %v877 = vpop.f32.mrb[0].mxu0
    %878 = vmatprep.mubr.bf16.mxu0 0
    %879 = vmatmul.mubr.bf16.gmra.mrb[0].mxu0 %v498
    %v880 = vpop.f32.mrb[0].mxu0
    %v881 = vadd.f32 0.0, %v880
    %v882 = vpop.f32.mrb[0].mxu0
    %v883 = vpop.f32.mrb[0].mxu0
    %v884 = vadd.f32 0.0, %v883
    %v885 = vpop.f32.mrb[0].mxu0
    %886 = vmatprep.mubr.bf16.mxu0 0
    %887 = vmatmul.mubr.bf16.gmra.mrb[0].mxu0 %v499
    %v888 = vpop.f32.mrb[0].mxu0
    %v889 = vadd.f32 0.0, %v888
    %v890 = vpop.f32.mrb[0].mxu0
    %v891 = vpop.f32.mrb[0].mxu0
    %v892 = vadd.f32 0.0, %v891
    %v893 = vpop.f32.mrb[0].mxu0
    %894 = vmatprep.mubr.bf16.mxu0 0
    %895 = vmatmul.mubr.bf16.gmra.mrb[0].mxu0 %v500
    %v896 = vpop.f32.mrb[0].mxu0
    %v897 = vadd.f32 0.0, %v896
    %v898 = vpop.f32.mrb[0].mxu0
    %v899 = vpop.f32.mrb[0].mxu0
    %v900 = vadd.f32 0.0, %v899
    %v901 = vpop.f32.mrb[0].mxu0
    %902 = vmatprep.mubr.bf16.mxu0 0
    %903 = vmatmul.mubr.bf16.gmra.mrb[0].mxu0 %v501
    %v904 = vpop.f32.mrb[0].mxu0
    %v905 = vadd.f32 0.0, %v904
    %v906 = vpop.f32.mrb[0].mxu0
    %v907 = vpop.f32.mrb[0].mxu0
    %v908 = vadd.f32 0.0, %v907
    %v909 = vpop.f32.mrb[0].mxu0
    %910 = vmatprep.mubr.bf16.mxu0 0
    %911 = vmatmul.mubr.bf16.gmra.mrb[0].mxu0 %v502
    %v912 = vpop.f32.mrb[0].mxu0
    %v913 = vadd.f32 0.0, %v912
    %v914 = vpop.f32.mrb[0].mxu0
    %v915 = vpop.f32.mrb[0].mxu0
    %v916 = vadd.f32 0.0, %v915
    %v917 = vpop.f32.mrb[0].mxu0
    %918 = vmatprep.mubr.bf16.mxu0 0
    %919 = vmatmul.mubr.bf16.gmra.mrb[0].mxu0 %v503
    %v920 = vpop.f32.mrb[0].mxu0
    %v921 = vadd.f32 0.0, %v920
    %v922 = vpop.f32.mrb[0].mxu0
    %v923 = vpop.f32.mrb[0].mxu0
    %v924 = vadd.f32 0.0, %v923
    %v925 = vpop.f32.mrb[0].mxu0
    %926 = vmatprep.mubr.bf16.mxu0 0
    %927 = vmatmul.mubr.bf16.gmra.mrb[0].mxu0 %v504
    %v928 = vpop.f32.mrb[0].mxu0
    %v929 = vadd.f32 0.0, %v928
    %v930 = vpop.f32.mrb[0].mxu0
    %v931 = vpop.f32.mrb[0].mxu0
    %v932 = vadd.f32 0.0, %v931
    %v933 = vpop.f32.mrb[0].mxu0
    %934 = vmatprep.mubr.bf16.mxu0 0
    %935 = vmatmul.mubr.bf16.gmra.mrb[0].mxu0 %v505
    %v936 = vpop.f32.mrb[0].mxu0
    %v937 = vadd.f32 0.0, %v936
    %v938 = vpop.f32.mrb[0].mxu0
    %v939 = vpop.f32.mrb[0].mxu0
    %v940 = vadd.f32 0.0, %v939
    %v941 = vpop.f32.mrb[0].mxu0
    %942 = vmatprep.mubr.bf16.mxu0 0
    %943 = vmatmul.mubr.bf16.gmra.mrb[0].mxu0 %v506
    %v944 = vpop.f32.mrb[0].mxu0
    %v945 = vadd.f32 0.0, %v944
    %v946 = vpop.f32.mrb[0].mxu0
    %v947 = vpop.f32.mrb[0].mxu0
    %v948 = vadd.f32 0.0, %v947
    %v949 = vpop.f32.mrb[0].mxu0
    %950 = vmatprep.mubr.bf16.mxu0 0
    %951 = vmatmul.mubr.bf16.gmra.mrb[0].mxu0 %v507
    %v952 = vpop.f32.mrb[0].mxu0
    %v953 = vadd.f32 0.0, %v952
    %v954 = vpop.f32.mrb[0].mxu0
    %v955 = vpop.f32.mrb[0].mxu0
    %v956 = vadd.f32 0.0, %v955
    %v957 = vpop.f32.mrb[0].mxu0
    %958 = vmatprep.mubr.bf16.mxu0 0
    %959 = vmatmul.mubr.bf16.gmra.mrb[0].mxu0 %v508
    %v960 = vpop.f32.mrb[0].mxu0
    %v961 = vadd.f32 0.0, %v960
    %v962 = vpop.f32.mrb[0].mxu0
    %v963 = vpop.f32.mrb[0].mxu0
    %v964 = vadd.f32 0.0, %v963
    %v965 = vpop.f32.mrb[0].mxu0
    %966 = vmatprep.mubr.bf16.mxu0 0
    %967 = vmatmul.mubr.bf16.gmra.mrb[0].mxu0 %v509
    %v968 = vpop.f32.mrb[0].mxu0
    %v969 = vadd.f32 0.0, %v968
    %v970 = vpop.f32.mrb[0].mxu0
    %v971 = vpop.f32.mrb[0].mxu0
    %v972 = vadd.f32 0.0, %v971
    %v973 = vpop.f32.mrb[0].mxu0
    %974 = vdwg.mxu0
    %v975 = vld [vmem:[#allocation8] sm:$0xff]
    %v976 = vld [vmem:[#allocation8 + $0x8] sm:$0xff]
    %v977 = vld [vmem:[#allocation8 + $0x10] sm:$0xff]
    %v978 = vpack.c.bf16 %v596, %v593
    %v979 = vpack.c.bf16 %v604, %v601
    %v980 = vpack.c.bf16 %v612, %v609
    %v981 = vpack.c.bf16 %v620, %v617
    %v982 = vpack.c.bf16 %v628, %v625
    %v983 = vpack.c.bf16 %v636, %v633
    %v984 = vpack.c.bf16 %v644, %v641
    %v985 = vpack.c.bf16 %v652, %v649
    %v986 = vpack.c.bf16 %v660, %v657
    %v987 = vpack.c.bf16 %v668, %v665
    %v988 = vpack.c.bf16 %v676, %v673
    %v989 = vpack.c.bf16 %v684, %v681
    %v990 = vpack.c.bf16 %v692, %v689
    %v991 = vpack.c.bf16 %v700, %v697
    %v992 = vpack.c.bf16 %v708, %v705
    %v993 = vpack.c.bf16 %v716, %v713
    %v994 = vpack.c.bf16 %v724, %v721
    %v995 = vpack.c.bf16 %v732, %v729
    %v996 = vpack.c.bf16 %v740, %v737
    %v997 = vpack.c.bf16 %v748, %v745
    %v998 = vpack.c.bf16 %v756, %v753
    %v999 = vpack.c.bf16 %v764, %v761
    %v1000 = vpack.c.bf16 %v772, %v769
    %v1001 = vpack.c.bf16 %v780, %v777
    %v1002 = vpack.c.bf16 %v788, %v785
    %v1003 = vpack.c.bf16 %v796, %v793
    %v1004 = vpack.c.bf16 %v804, %v801
    %v1005 = vpack.c.bf16 %v812, %v809
    %v1006 = vpack.c.bf16 %v820, %v817
    %v1007 = vpack.c.bf16 %v828, %v825
    %v1008 = vpack.c.bf16 %v836, %v833
    %v1009 = vpack.c.bf16 %v844, %v841
    %v1010 = vpack.c.bf16 %v852, %v849
    %v1011 = vpack.c.bf16 %v860, %v857
    %v1012 = vpack.c.bf16 %v868, %v865
    %v1013 = vpack.c.bf16 %v876, %v873
    %v1014 = vpack.c.bf16 %v884, %v881
    %v1015 = vpack.c.bf16 %v892, %v889
    %v1016 = vpack.c.bf16 %v900, %v897
    %v1017 = vpack.c.bf16 %v908, %v905
    %v1018 = vpack.c.bf16 %v916, %v913
    %v1019 = vpack.c.bf16 %v924, %v921
    %v1020 = vpack.c.bf16 %v932, %v929
    %v1021 = vpack.c.bf16 %v940, %v937
    %v1022 = vpack.c.bf16 %v948, %v945
    %v1023 = vpack.c.bf16 %v956, %v953
    %v1024 = vpack.c.bf16 %v964, %v961
    %v1025 = vpack.c.bf16 %v972, %v969
    %v1029 = vunpack.c.l.b16 %v975
    %v1030 = vunpack.c.h.b16 %v975
    %v1031 = vunpack.c.l.b16 %v976
    %v1032 = vunpack.c.h.b16 %v976
    %v1033 = vunpack.c.l.b16 %v977
    %v1034 = vunpack.c.h.b16 %v977
    %v1035 = vpack.c.b16 %v1029, %v1029
    %v1036 = vpack.c.b16 %v1030, %v1030
    %v1037 = vpack.c.b16 %v1031, %v1031
    %v1038 = vpack.c.b16 %v1032, %v1032
    %v1039 = vpack.c.b16 %v1033, %v1033
    %v1040 = vpack.c.b16 %v1034, %v1034
    %1047 = vmatprep.subr.bf16.mxu0 0
    %1048 = vmatpush1.bf16.msra.mxu0 %v978
    %1049 = vmatprep.subr.bf16.mxu0 0
    %1050 = vmatpush1.bf16.msra.mxu0 %v979
    %1051 = vmatprep.subr.bf16.mxu0 0
    %1052 = vmatpush1.bf16.msra.mxu0 %v980
    %1053 = vmatprep.subr.bf16.mxu0 0
    %1054 = vmatpush1.bf16.msra.mxu0 %v981
    %1055 = vmatprep.subr.bf16.mxu0 0
    %1056 = vmatpush1.bf16.msra.mxu0 %v982
    %1057 = vmatprep.subr.bf16.mxu0 0
    %1058 = vmatpush1.bf16.msra.mxu0 %v983
    %1059 = vmatprep.subr.bf16.mxu0 0
    %1060 = vmatpush1.bf16.msra.mxu0 %v984
    %1061 = vmatprep.subr.bf16.mxu0 0
    %1062 = vmatpush1.bf16.msra.mxu0 %v985
    %1063 = vmatprep.subr.bf16.mxu0 0
    %1064 = vmatpush1.bf16.msra.mxu0 %v986
    %1065 = vmatprep.subr.bf16.mxu0 0
    %1066 = vmatpush1.bf16.msra.mxu0 %v987
    %1067 = vmatprep.subr.bf16.mxu0 0
    %1068 = vmatpush1.bf16.msra.mxu0 %v988
    %1069 = vmatprep.subr.bf16.mxu0 0
    %1070 = vmatpush1.bf16.msra.mxu0 %v989
    %1071 = vmatprep.subr.bf16.mxu0 0
    %1072 = vmatpush1.bf16.msra.mxu0 %v990
    %1073 = vmatprep.subr.bf16.mxu0 0
    %1074 = vmatpush1.bf16.msra.mxu0 %v991
    %1075 = vmatprep.subr.bf16.mxu0 0
    %1076 = vmatpush1.bf16.msra.mxu0 %v992
    %1077 = vmatprep.subr.bf16.mxu0 0
    %1078 = vmatpush1.bf16.msra.mxu0 %v993
    %1079 = vmatprep.mubr.bf16.mxu0 %v1036
    %1080 = vmatmul.mubr.bf16.gmra.mrb[0].mxu0 %v1035
    %v1081 = vpop.f32.mrb[0].mxu0
    %v1082 = vadd.f32 0.0, %v1081
    %v1083 = vpop.f32.mrb[0].mxu0
    %v1084 = vpop.f32.mrb[0].mxu0
    %v1085 = vpop.f32.mrb[0].mxu0
    %1086 = vdwg.mxu0
    %1087 = vmatprep.subr.bf16.mxu0 0
    %1088 = vmatpush1.bf16.msra.mxu0 %v994
    %1089 = vmatprep.subr.bf16.mxu0 0
    %1090 = vmatpush1.bf16.msra.mxu0 %v995
    %1091 = vmatprep.subr.bf16.mxu0 0
    %1092 = vmatpush1.bf16.msra.mxu0 %v996
    %1093 = vmatprep.subr.bf16.mxu0 0
    %1094 = vmatpush1.bf16.msra.mxu0 %v997
    %1095 = vmatprep.subr.bf16.mxu0 0
    %1096 = vmatpush1.bf16.msra.mxu0 %v998
    %1097 = vmatprep.subr.bf16.mxu0 0
    %1098 = vmatpush1.bf16.msra.mxu0 %v999
    %1099 = vmatprep.subr.bf16.mxu0 0
    %1100 = vmatpush1.bf16.msra.mxu0 %v1000
    %1101 = vmatprep.subr.bf16.mxu0 0
    %1102 = vmatpush1.bf16.msra.mxu0 %v1001
    %1103 = vmatprep.subr.bf16.mxu0 0
    %1104 = vmatpush1.bf16.msra.mxu0 %v1002
    %1105 = vmatprep.subr.bf16.mxu0 0
    %1106 = vmatpush1.bf16.msra.mxu0 %v1003
    %1107 = vmatprep.subr.bf16.mxu0 0
    %1108 = vmatpush1.bf16.msra.mxu0 %v1004
    %1109 = vmatprep.subr.bf16.mxu0 0
    %1110 = vmatpush1.bf16.msra.mxu0 %v1005
    %1111 = vmatprep.subr.bf16.mxu0 0
    %1112 = vmatpush1.bf16.msra.mxu0 %v1006
    %1113 = vmatprep.subr.bf16.mxu0 0
    %1114 = vmatpush1.bf16.msra.mxu0 %v1007
    %1115 = vmatprep.subr.bf16.mxu0 0
    %1116 = vmatpush1.bf16.msra.mxu0 %v1008
    %1117 = vmatprep.subr.bf16.mxu0 0
    %1118 = vmatpush1.bf16.msra.mxu0 %v1009
    %1119 = vmatprep.mubr.bf16.mxu0 %v1038
    %1120 = vmatmul.mubr.bf16.gmra.mrb[0].mxu0 %v1037
    %v1121 = vpop.f32.mrb[0].mxu0
    %v1122 = vadd.f32 %v1082, %v1121
    %v1123 = vpop.f32.mrb[0].mxu0
    %v1124 = vpop.f32.mrb[0].mxu0
    %v1125 = vpop.f32.mrb[0].mxu0
    %1126 = vdwg.mxu0
    %1127 = vmatprep.subr.bf16.mxu0 0
    %1128 = vmatpush1.bf16.msra.mxu0 %v1010
    %1129 = vmatprep.subr.bf16.mxu0 0
    %1130 = vmatpush1.bf16.msra.mxu0 %v1011
    %1131 = vmatprep.subr.bf16.mxu0 0
    %1132 = vmatpush1.bf16.msra.mxu0 %v1012
    %1133 = vmatprep.subr.bf16.mxu0 0
    %1134 = vmatpush1.bf16.msra.mxu0 %v1013
    %1135 = vmatprep.subr.bf16.mxu0 0
    %1136 = vmatpush1.bf16.msra.mxu0 %v1014
    %1137 = vmatprep.subr.bf16.mxu0 0
    %1138 = vmatpush1.bf16.msra.mxu0 %v1015
    %1139 = vmatprep.subr.bf16.mxu0 0
    %1140 = vmatpush1.bf16.msra.mxu0 %v1016
    %1141 = vmatprep.subr.bf16.mxu0 0
    %1142 = vmatpush1.bf16.msra.mxu0 %v1017
    %1143 = vmatprep.subr.bf16.mxu0 0
    %1144 = vmatpush1.bf16.msra.mxu0 %v1018
    %1145 = vmatprep.subr.bf16.mxu0 0
    %1146 = vmatpush1.bf16.msra.mxu0 %v1019
    %1147 = vmatprep.subr.bf16.mxu0 0
    %1148 = vmatpush1.bf16.msra.mxu0 %v1020
    %1149 = vmatprep.subr.bf16.mxu0 0
    %1150 = vmatpush1.bf16.msra.mxu0 %v1021
    %1151 = vmatprep.subr.bf16.mxu0 0
    %1152 = vmatpush1.bf16.msra.mxu0 %v1022
    %1153 = vmatprep.subr.bf16.mxu0 0
    %1154 = vmatpush1.bf16.msra.mxu0 %v1023
    %1155 = vmatprep.subr.bf16.mxu0 0
    %1156 = vmatpush1.bf16.msra.mxu0 %v1024
    %1157 = vmatprep.subr.bf16.mxu0 0
    %1158 = vmatpush1.bf16.msra.mxu0 %v1025
    %1159 = vmatprep.mubr.bf16.mxu0 %v1040
    %1160 = vmatmul.mubr.bf16.gmra.mrb[0].mxu0 %v1039
    %v1161 = vpop.f32.mrb[0].mxu0
    %v1162 = vadd.f32 %v1122, %v1161
    %v1163 = vpop.f32.mrb[0].mxu0
    %v1164 = vpop.f32.mrb[0].mxu0
    %v1165 = vpop.f32.mrb[0].mxu0
    %1166 = vdwg.mxu0
    %v1168 = vrot.slane %v1162, 7
    %1169 = vrot.lane.b32.xlu0 %v1168, 122
    %v1170 = vpop.permute.xlu0 %1169
    %vm1172 = vcmask 1040384
    %v1173 = vsel %vm1172, %v1162, %v1170
    %s1174 = sld [smem:[#allocation9]]
    %v1175 = vstv %s1174
    %v1176 = vadd.f32 %v1173, %v1175
    %v1177 = vrot.slane %v1162, 1
    %1179 = vrot.lane.b32.xlu0 %v1162, 122
    %v1180 = vpop.permute.xlu0 %1179
    %v1182 = vsel %vm1172, %v1177, %v1180
    %s1183 = sld [smem:[#allocation9 + $0x1]]
    %v1184 = vstv %s1183
    %v1185 = vadd.f32 %v1182, %v1184
    %vm1186 = vcmask 41984
    %v1187 = vsel %vm1186, %v1176, -inf
    %1188 = vmax.xlane.f32.xlu0 %v1187
    %v1189 = vpop.xlane.xlu0 %1188
    %v1190 = vsub.f32 %v1176, %v1189
    %v1191 = vmul.f32 %v1190, 1.442695
    %v1192 = vpow.pop %v1191
    %v1193 = vsel %vm1186, %v1192, 0.0
    %1194 = vadd.xlane.f32.xlu0 %v1193
    %v1195 = vpop.xlane.xlu0 %1194
    %v1196 = vlog2.pop %v1195
    %v1197 = vmul.f32 %v1196, 0.6931472
    %v1198 = vsub.f32 %v1190, %v1197
    %vm1199 = vcmask 140384
    %v1200 = vsel %vm1199, %v1185, -inf
    %1201 = vmax.xlane.f32.xlu0 %v1200
    %v1202 = vpop.xlane.xlu0 %1201
    %v1203 = vsub.f32 %v1185, %v1202
    %v1204 = vmul.f32 %v1203, 1.442695
    %v1205 = vpow.pop %v1204
    %1207 = vrot.lane.b32.xlu0 %v1205, 116
    %v1208 = vpop.permute.xlu0 %1207
    %v1210 = vsel %vm1186, %v1208, 0.0
    %1211 = vadd.xlane.f32.xlu0 %v1210
    %v1212 = vpop.xlane.xlu0 %1211
    %v1213 = vlog2.pop %v1212
    %v1214 = vmul.f32 %v1213, 0.6931472
    %v1215 = vsub.f32 %v1203, %v1214
    %v1217 = vrot.slane %v1215, 6
    %1218 = vrot.lane.b32.xlu0 %v1217, 116
    %v1219 = vpop.permute.xlu0 %1218
    %vm1221 = vcmask 1041408
    %v1222 = vsel %vm1221, %v1198, %v1219
    %vm1223 = vcmask 44032
    %1224 = vst.msk [vmem:[#allocation10] sm:$0xf] %vm1223, %v1222
    // Predicated region
    $region34: #{tpu_custom_call.1} parent=1 // pred_check
      _
    $region35: #{tpu_custom_call.1} parent=1 // pred_check_branch
      %1226 = sbr.rel (0) target = $region37
    $region36: #{tpu_custom_call.1} parent=1 // pred_region
      %s1228 = ssub.s32 64, 64
      %1229 = vsyncadd [#allocation4], %s1228
      %s1231 = sshll.u32 [#allocation10], 4
      %s1232 = int_to_ptr.vmem [resolvable:$true] %s1231
      %1234 = dma.vmem_to_hbm [thread:$0]  %s1232, 64, %s4, [#allocation4]
    $region37: #{tpu_custom_call.1} parent=1 // pred_fallthru
      _
    // Predicated region
    $region38: #{tpu_custom_call.1} parent=1 // pred_check
      _
    $region39: #{tpu_custom_call.1} parent=1 // pred_check_branch
      %1236 = sbr.rel (0) target = $region41
    $region40: #{tpu_custom_call.1} parent=1 // pred_region
      %1237 = dma.done [#allocation4], 64
    $region41: #{tpu_custom_call.1} parent=1 // pred_fallthru
      _
    %1238 = vsyncpa [#allocation3], 1
    %1239 = vsyncpa [#allocation7], 1
    %1240 = vsyncpa [#allocation4], 1
    %1241 = vsyncpa [#allocation5], 1

</llo_original>
